<compile_context>
chip_gen: v5e
topology: v5e:2x2
jax: 0.10.0
libtpu: 0.0.40
codegen_flags: <defaults>
</compile_context>

<pallas_src>
import functools

import jax
import jax.numpy as jnp
from jax.experimental import pallas as pl
from jax.experimental.pallas import tpu as pltpu

HID1 = 64
HID2 = 128


def _supports_bf16_eup():
    """bf16 VPU/EUP exists on v6e and later; v2-v5 (incl. v5e/v5p) lack it."""
    try:
        kind = jax.devices()[0].device_kind.lower()
    except Exception:
        return False
    return not any(t in kind for t in ("v2", "v3", "v4", "v5"))


def _critic_kernel(obs_ref, act_ref,
                   w1a_ref, w1b_ref, b1_ref,
                   w2_ref, b2_ref,
                   w3_ref, b3_ref,
                   q_ref, *, lane_dense_out: bool, bf16_tanh: bool):
    # ----- layer 1: split matmul (no lane-axis concat), f32 accumulate + bias
    obs = obs_ref[...].astype(jnp.bfloat16)
    act = act_ref[...].astype(jnp.bfloat16)
    a1 = (jnp.dot(obs, w1a_ref[...], preferred_element_type=jnp.float32)
          + jnp.dot(act, w1b_ref[...], preferred_element_type=jnp.float32)
          + b1_ref[...])
    if bf16_tanh:
        h1 = jnp.tanh(a1.astype(jnp.bfloat16))       # bf16 EUP tanh -> MXU direct
    else:
        h1 = jnp.tanh(a1).astype(jnp.bfloat16)       # f32 tanh (v5e), cast for MXU

    # ----- layer 2 -----
    a2 = (jnp.dot(h1, w2_ref[...], preferred_element_type=jnp.float32)
          + b2_ref[...])
    if bf16_tanh:
        h2 = jnp.tanh(a2.astype(jnp.bfloat16))       # bf16
    else:
        h2 = jnp.tanh(a2)                            # f32

    # ----- layer 3 -----
    if lane_dense_out:
        # output_size == 1: VPU multiply + lane reduce (f32 accumulation),
        # stored lane-dense as a (1, TB) row (no masked narrow vst).
        # TODO(synk): verify in the bundle dump that the sublane->lane
        # relayout of the (TB,) reduce result is not a hot vxpose chain.
        prod = (h2 * w3_ref[...]).astype(jnp.float32)
        q_row = jnp.sum(prod, axis=-1)                # (TB,)
        q_ref[...] = (q_row[None, :] + b3_ref[...]).astype(q_ref.dtype)
    else:
        q = (jnp.dot(h2.astype(jnp.float32), w3_ref[...],
                     preferred_element_type=jnp.float32)
             + b3_ref[...])
        q_ref[...] = q.astype(q_ref.dtype)


def critic_forward(obs, act, params, *, block_b=2048, bf16_tanh=None):
    """obs: [B, obs_dim], act: [B, act_dim] -> Q: [B] (when output_size == 1)."""
    w1, b1, w2, b2, w3, b3 = params
    B, obs_dim = obs.shape
    act_dim = act.shape[1]
    input_size = obs_dim + act_dim
    out_size = w3.shape[1]
    assert block_b % 128 == 0, "batch tile must be a multiple of 128 lanes"
    if bf16_tanh is None:
        bf16_tanh = _supports_bf16_eup()

    # ---- batch tiling ----
    if B <= 256:
        # Single small tile; pad rows to a multiple of 8 (tiny copy).
        tb = max(8, ((B + 7) // 8) * 8)
        b_arr = tb
        if b_arr != B:
            pad = ((0, b_arr - B), (0, 0))
            obs = jnp.pad(obs, pad)
            act = jnp.pad(act, pad)
    else:
        # >= 2 lane-dense (128-multiple) tiles so both v7x TensorCores get
        # work; prefer an even tile count.  No wrapper-side pad: Pallas masks
        # the ragged final tile (rows are independent across all layers).
        half = ((pl.cdiv(B, 2) + 127) // 128) * 128
        tb = min(block_b, half)
        nb0 = pl.cdiv(B, tb)
        if nb0 % 2 == 1 and tb - 128 >= 128 and pl.cdiv(B, tb - 128) % 2 == 0:
            tb -= 128
        b_arr = B
    nb = pl.cdiv(b_arr, tb)

    # ---- weights: split W1 by rows; bf16 for the MXU dots ----
    w1a = w1[:obs_dim].astype(jnp.bfloat16)
    w1b = w1[obs_dim:].astype(jnp.bfloat16)
    w2b = w2.astype(jnp.bfloat16)

    lane_dense = (out_size == 1)
    if lane_dense:
        w3k = w3.reshape(1, HID2)
        if bf16_tanh:
            w3k = w3k.astype(jnp.bfloat16)           # bf16 VPU multiply
        out_shape = jax.ShapeDtypeStruct((1, b_arr), jnp.float32)
        out_spec = pl.BlockSpec((1, tb), lambda i: (0, i))
    else:
        w3k = w3                                     # [HID2, out_size] MXU fallback
        out_shape = jax.ShapeDtypeStruct((b_arr, out_size), jnp.float32)
        out_spec = pl.BlockSpec((tb, out_size), lambda i: (i, 0))

    # Weights/biases stay VMEM-resident across batch-grid steps.
    def resident(arr):
        return pl.BlockSpec(arr.shape, lambda i: (0, 0))

    flops = 2 * b_arr * (input_size * HID1 + HID1 * HID2 + HID2 * out_size)
    transcendentals = b_arr * (HID1 + HID2)
    weight_bytes = ((w1a.size + w1b.size + w2b.size) * 2
                    + (b1.size + b2.size + b3.size) * 4
                    + w3k.size * (2 if w3k.dtype == jnp.bfloat16 else 4))
    bytes_accessed = (obs.dtype.itemsize * b_arr * obs_dim
                      + act.dtype.itemsize * b_arr * act_dim
                      + 4 * b_arr * out_size + weight_bytes)

    kernel = functools.partial(_critic_kernel,
                               lane_dense_out=lane_dense,
                               bf16_tanh=bf16_tanh)

    q = pl.pallas_call(
        kernel,
        out_shape=out_shape,
        grid=(nb,),
        in_specs=[
            pl.BlockSpec((tb, obs_dim), lambda i: (i, 0)),
            pl.BlockSpec((tb, act_dim), lambda i: (i, 0)),
            resident(w1a), resident(w1b), resident(b1),
            resident(w2b), resident(b2),
            resident(w3k), resident(b3),
        ],
        out_specs=out_spec,
        compiler_params=pltpu.CompilerParams(
            dimension_semantics=("parallel",)),
        cost_estimate=pl.CostEstimate(
            flops=flops,
            transcendentals=transcendentals,
            bytes_accessed=bytes_accessed),
    )(obs, act, w1a, w1b, b1, w2b, b2, w3k, b3)

    if lane_dense:
        return q[0, :B]          # [B]  == torch.squeeze(Q, dim=1)
    return q[:B]                 # [B, out_size] (squeeze is a no-op)


def init_params(key, obs_dim, act_dim, output_size):
    """nn.Linear-style init: U(-1/sqrt(fan_in), 1/sqrt(fan_in)).
    Weights stored [in_features, out_features]; biases [1, out_features]."""
    input_size = obs_dim + act_dim
    dims = [(input_size, HID1), (HID1, HID2), (HID2, output_size)]
    params = []
    for fan_in, fan_out in dims:
        key, kw, kb = jax.random.split(key, 3)
        bound = 1.0 / (fan_in ** 0.5)
        w = jax.random.uniform(kw, (fan_in, fan_out), jnp.float32, -bound, bound)
        b = jax.random.uniform(kb, (1, fan_out), jnp.float32, -bound, bound)
        params += [w, b]
    return tuple(params)


def reference_forward(obs, act, params):
    """Pure-JAX f32 reference matching the PyTorch module semantics."""
    w1, b1, w2, b2, w3, b3 = params
    concat = jnp.concatenate([obs, act], axis=1)
    hid1 = jnp.tanh(concat @ w1 + b1)
    hid2 = jnp.tanh(hid1 @ w2 + b2)
    q = hid2 @ w3 + b3
    if q.shape[1] == 1:
        q = jnp.squeeze(q, axis=1)
    return q


if __name__ == "__main__":
    key = jax.random.PRNGKey(0)
    k_obs, k_act, k_params = jax.random.split(key, 3)

    # Small shapes: batch=8, obs_dim=8, act_dim=4 -> input_size=12, output_size=1
    B, obs_dim, act_dim = 8, 8, 4
    output_size = 1

    obs = jax.random.normal(k_obs, (B, obs_dim), jnp.float32)
    act = jax.random.normal(k_act, (B, act_dim), jnp.float32)
    params = init_params(k_params, obs_dim, act_dim, output_size)

    q = critic_forward(obs, act, params)
    q = jax.block_until_ready(q)

    q_ref = reference_forward(obs, act, params)
    assert q.shape == (B,), f"expected shape {(B,)}, got {q.shape}"
    # bf16 MXU inputs (+ bf16 tanh on v6e/v7x) vs. the f32 reference.
    assert jnp.allclose(q, q_ref, atol=5e-2, rtol=5e-2), \
        f"mismatch vs reference: max|diff|={float(jnp.max(jnp.abs(q - q_ref)))}"

    print("KERNEL_OK")
</pallas_src>

<mosaic_0001>
module attributes {stable_mosaic.version = 11 : i64} {
  func.func @_critic_kernel(%arg0: i32, %arg1: memref<8x8xf32, #tpu.memory_space<vmem>>, %arg2: memref<8x4xf32, #tpu.memory_space<vmem>>, %arg3: memref<8x64xbf16, #tpu.memory_space<vmem>>, %arg4: memref<4x64xbf16, #tpu.memory_space<vmem>>, %arg5: memref<1x64xf32, #tpu.memory_space<vmem>>, %arg6: memref<64x128xbf16, #tpu.memory_space<vmem>>, %arg7: memref<1x128xf32, #tpu.memory_space<vmem>>, %arg8: memref<1x128xbf16, #tpu.memory_space<vmem>>, %arg9: memref<1x1xf32, #tpu.memory_space<vmem>>, %arg10: memref<1x8xf32, #tpu.memory_space<vmem>>) attributes {dimension_semantics = [#tpu.dimension_semantics<parallel>], iteration_bounds = array<i64: 1>, scalar_prefetch = 0 : i64, scratch_operands = 0 : i64, tpu.core_type = #tpu.core_type<tc>, window_params = [{transform_indices = @transform_0, window_bounds = array<i64: 8, 8>}, {transform_indices = @transform_1, window_bounds = array<i64: 8, 4>}, {pipeline_mode = #tpu.pipeline_mode<synchronous>, transform_indices = @transform_2, window_bounds = array<i64: 8, 64>}, {pipeline_mode = #tpu.pipeline_mode<synchronous>, transform_indices = @transform_3, window_bounds = array<i64: 4, 64>}, {pipeline_mode = #tpu.pipeline_mode<synchronous>, transform_indices = @transform_4, window_bounds = array<i64: 1, 64>}, {pipeline_mode = #tpu.pipeline_mode<synchronous>, transform_indices = @transform_5, window_bounds = array<i64: 64, 128>}, {pipeline_mode = #tpu.pipeline_mode<synchronous>, transform_indices = @transform_6, window_bounds = array<i64: 1, 128>}, {pipeline_mode = #tpu.pipeline_mode<synchronous>, transform_indices = @transform_7, window_bounds = array<i64: 1, 128>}, {pipeline_mode = #tpu.pipeline_mode<synchronous>, transform_indices = @transform_8, window_bounds = array<i64: 1, 1>}, {transform_indices = @transform_9, window_bounds = array<i64: 1, 8>}]} {
    %c0 = arith.constant 0 : index
    %c0_0 = arith.constant 0 : index
    %0 = vector.load %arg1[%c0, %c0_0] : memref<8x8xf32, #tpu.memory_space<vmem>>, vector<8x8xf32>
    %1 = arith.truncf %0 : vector<8x8xf32> to vector<8x8xbf16>
    %c0_1 = arith.constant 0 : index
    %c0_2 = arith.constant 0 : index
    %2 = vector.load %arg2[%c0_1, %c0_2] : memref<8x4xf32, #tpu.memory_space<vmem>>, vector<8x4xf32>
    %3 = arith.truncf %2 : vector<8x4xf32> to vector<8x4xbf16>
    %c0_3 = arith.constant 0 : index
    %c0_4 = arith.constant 0 : index
    %4 = vector.load %arg3[%c0_3, %c0_4] : memref<8x64xbf16, #tpu.memory_space<vmem>>, vector<8x64xbf16>
    %cst = arith.constant dense<0.000000e+00> : vector<8x64xf32>
    %5 = tpu.matmul %1, %4, %cst {dimension_numbers = #tpu.dot_dimension_numbers<[1], [0], [0], [1], [0, 0, 1, 1], [], []>} : vector<8x8xbf16>, vector<8x64xbf16>, vector<8x64xf32> -> vector<8x64xf32>
    %c0_5 = arith.constant 0 : index
    %c0_6 = arith.constant 0 : index
    %6 = vector.load %arg4[%c0_5, %c0_6] : memref<4x64xbf16, #tpu.memory_space<vmem>>, vector<4x64xbf16>
    %cst_7 = arith.constant dense<0.000000e+00> : vector<8x64xf32>
    %7 = tpu.matmul %3, %6, %cst_7 {dimension_numbers = #tpu.dot_dimension_numbers<[1], [0], [0], [1], [0, 0, 1, 1], [], []>} : vector<8x4xbf16>, vector<4x64xbf16>, vector<8x64xf32> -> vector<8x64xf32>
    %8 = arith.addf %5, %7 : vector<8x64xf32>
    %c0_8 = arith.constant 0 : index
    %c0_9 = arith.constant 0 : index
    %9 = vector.load %arg5[%c0_8, %c0_9] : memref<1x64xf32, #tpu.memory_space<vmem>>, vector<1x64xf32>
    %10 = vector.broadcast %9 : vector<1x64xf32> to vector<8x64xf32>
    %11 = arith.addf %8, %10 : vector<8x64xf32>
    %12 = arith.truncf %11 : vector<8x64xf32> to vector<8x64xbf16>
    %13 = math.tanh %12 : vector<8x64xbf16>
    %c0_10 = arith.constant 0 : index
    %c0_11 = arith.constant 0 : index
    %14 = vector.load %arg6[%c0_10, %c0_11] : memref<64x128xbf16, #tpu.memory_space<vmem>>, vector<64x128xbf16>
    %cst_12 = arith.constant dense<0.000000e+00> : vector<8x128xf32>
    %15 = tpu.matmul %13, %14, %cst_12 {dimension_numbers = #tpu.dot_dimension_numbers<[1], [0], [0], [1], [0, 0, 1, 1], [], []>} : vector<8x64xbf16>, vector<64x128xbf16>, vector<8x128xf32> -> vector<8x128xf32>
    %c0_13 = arith.constant 0 : index
    %c0_14 = arith.constant 0 : index
    %16 = vector.load %arg7[%c0_13, %c0_14] : memref<1x128xf32, #tpu.memory_space<vmem>>, vector<1x128xf32>
    %17 = vector.broadcast %16 : vector<1x128xf32> to vector<8x128xf32>
    %18 = arith.addf %15, %17 : vector<8x128xf32>
    %19 = arith.truncf %18 : vector<8x128xf32> to vector<8x128xbf16>
    %20 = math.tanh %19 : vector<8x128xbf16>
    %c0_15 = arith.constant 0 : index
    %c0_16 = arith.constant 0 : index
    %21 = vector.load %arg8[%c0_15, %c0_16] : memref<1x128xbf16, #tpu.memory_space<vmem>>, vector<1x128xbf16>
    %22 = vector.broadcast %21 : vector<1x128xbf16> to vector<8x128xbf16>
    %23 = arith.mulf %20, %22 : vector<8x128xbf16>
    %24 = arith.extf %23 : vector<8x128xbf16> to vector<8x128xf32>
    %cst_17 = arith.constant dense<0.000000e+00> : vector<8xf32>
    %25 = vector.multi_reduction <add>, %24, %cst_17 [1] : vector<8x128xf32> to vector<8xf32>
    %26 = vector.shape_cast %25 : vector<8xf32> to vector<1x8xf32>
    %c0_18 = arith.constant 0 : index
    %c0_19 = arith.constant 0 : index
    %27 = vector.load %arg9[%c0_18, %c0_19] : memref<1x1xf32, #tpu.memory_space<vmem>>, vector<1x1xf32>
    %28 = vector.broadcast %27 : vector<1x1xf32> to vector<1x8xf32>
    %29 = arith.addf %26, %28 : vector<1x8xf32>
    %c0_20 = arith.constant 0 : index
    %c0_21 = arith.constant 0 : index
    %30 = vector.load %arg10[%c0_20, %c0_21] : memref<1x8xf32, #tpu.memory_space<vmem>>, vector<1x8xf32>
    tpu.vector_store %arg10[%c0_20, %c0_21], %29 {strides = array<i32>} : memref<1x8xf32, #tpu.memory_space<vmem>>, vector<1x8xf32>,
    return
  }
  func.func @transform_0(%arg0: i32) -> (i32, i32) {
    %c0_i32 = arith.constant 0 : i32
    %c0_i32_0 = arith.constant 0 : i32
    return %arg0, %c0_i32 : i32, i32
  }
  func.func @transform_1(%arg0: i32) -> (i32, i32) {
    %c0_i32 = arith.constant 0 : i32
    %c0_i32_0 = arith.constant 0 : i32
    return %arg0, %c0_i32 : i32, i32
  }
  func.func @transform_2(%arg0: i32) -> (i32, i32) {
    %c0_i32 = arith.constant 0 : i32
    %c0_i32_0 = arith.constant 0 : i32
    %c0_i32_1 = arith.constant 0 : i32
    return %c0_i32, %c0_i32_0 : i32, i32
  }
  func.func @transform_3(%arg0: i32) -> (i32, i32) {
    %c0_i32 = arith.constant 0 : i32
    %c0_i32_0 = arith.constant 0 : i32
    %c0_i32_1 = arith.constant 0 : i32
    return %c0_i32, %c0_i32_0 : i32, i32
  }
  func.func @transform_4(%arg0: i32) -> (i32, i32) {
    %c0_i32 = arith.constant 0 : i32
    %c0_i32_0 = arith.constant 0 : i32
    %c0_i32_1 = arith.constant 0 : i32
    return %c0_i32, %c0_i32_0 : i32, i32
  }
  func.func @transform_5(%arg0: i32) -> (i32, i32) {
    %c0_i32 = arith.constant 0 : i32
    %c0_i32_0 = arith.constant 0 : i32
    %c0_i32_1 = arith.constant 0 : i32
    return %c0_i32, %c0_i32_0 : i32, i32
  }
  func.func @transform_6(%arg0: i32) -> (i32, i32) {
    %c0_i32 = arith.constant 0 : i32
    %c0_i32_0 = arith.constant 0 : i32
    %c0_i32_1 = arith.constant 0 : i32
    return %c0_i32, %c0_i32_0 : i32, i32
  }
  func.func @transform_7(%arg0: i32) -> (i32, i32) {
    %c0_i32 = arith.constant 0 : i32
    %c0_i32_0 = arith.constant 0 : i32
    %c0_i32_1 = arith.constant 0 : i32
    return %c0_i32, %c0_i32_0 : i32, i32
  }
  func.func @transform_8(%arg0: i32) -> (i32, i32) {
    %c0_i32 = arith.constant 0 : i32
    %c0_i32_0 = arith.constant 0 : i32
    %c0_i32_1 = arith.constant 0 : i32
    return %c0_i32, %c0_i32_0 : i32, i32
  }
  func.func @transform_9(%arg0: i32) -> (i32, i32) {
    %c0_i32 = arith.constant 0 : i32
    %c0_i32_0 = arith.constant 0 : i32
    return %c0_i32, %arg0 : i32, i32
  }
}

</mosaic_0001>

<llo_original>
// kernel: tpu_custom_call.1
$region0: #{tpu_custom_call.1}
  #allocation0 [shape = 'u32[]', space=smem, size = 0x4, offset = 0x4, fixed_abs, tag = 'smem constant byte address 0x4 - core index']
  #allocation1 [shape = 'u32[72,128]{1,0:T(1,128)}', space=vmem, size = 0x9000, scoped, tag = 'internal scratch']
  #allocation2 [shape = 'f32[1,1]{1,0:T(1,128)S(1)}', space=vmem, size = 0x200, scoped, tag = 'scoped memory for tpu_custom_call.1']
  %s0 = inlined_call_operand.vmem [shape: f32[8,8], index: 0, kind: input, shape index: {}]
  %s1 = inlined_call_operand.vmem [shape: f32[8,4], index: 1, kind: input, shape index: {}]
  %s2 = inlined_call_operand.vmem [shape: bf16[8,64], index: 2, kind: input, shape index: {}]
  %s3 = inlined_call_operand.vmem [shape: bf16[4,64], index: 3, kind: input, shape index: {}]
  %s4 = inlined_call_operand.vmem [shape: f32[1,64], index: 4, kind: input, shape index: {}]
  %s5 = inlined_call_operand.hbm [shape: bf16[64,128], index: 5, kind: input, shape index: {}]
  %s6 = inlined_call_operand.vmem [shape: f32[1,128], index: 6, kind: input, shape index: {}]
  %s7 = inlined_call_operand.vmem [shape: bf16[1,128], index: 7, kind: input, shape index: {}]
  %s8 = inlined_call_operand.<no memory space> [shape: f32[1,1], index: 8, kind: input, shape index: {}]
  %s9 = inlined_call_operand.hbm [shape: f32[1,8], index: 9, kind: output, shape index: {}]
  %s10 = sld [smem:[#allocation0]]
  $region50: #{tpu_custom_call.1} parent=0
    _
  %s12 = ssub.s32 1, %s10
  %s13 = scalar_select 0, %s12, %s10
  %v14 = vstv %s8
  %15 = vst [vmem:[#allocation2] sm:$0x1] %v14
  $region1: #{tpu_custom_call.1} parent=0
    #allocation3 [shape = 'u8[16384]{0}', space=vmem, size = 0x4000, scoped, tag = 'input window, operand 5, single buffered']
    #allocation4 [shape = 's32[1]{0}', space=sflag, size = 0x4, scoped, tag = 'scoped memory for tpu_custom_call.1']
    #allocation5 [shape = 's32[1]{0}', space=sflag, size = 0x4, scoped, tag = 'scoped memory for tpu_custom_call.1']
    #allocation6 [shape = 'u8[512]{0}', space=vmem, size = 0x400, scoped, tag = 'output window, operand 0, single buffered']
    %16 = vsyncpa [#allocation4], 0
    %17 = vsyncpa [#allocation5], 0
    // Predicated region
    $region2: #{tpu_custom_call.1} parent=1 // pred_check
      _
    $region3: #{tpu_custom_call.1} parent=1 // pred_check_branch
      %19 = sbr.rel (0) target = $region5
    $region4: #{tpu_custom_call.1} parent=1 // pred_region
      _
    $region5: #{tpu_custom_call.1} parent=1 // pred_fallthru
      _
    // Predicated region
    $region6: #{tpu_custom_call.1} parent=1 // pred_check
      _
    $region7: #{tpu_custom_call.1} parent=1 // pred_check_branch
      %21 = sbr.rel (0) target = $region9
    $region8: #{tpu_custom_call.1} parent=1 // pred_region
      _
    $region9: #{tpu_custom_call.1} parent=1 // pred_fallthru
      _
    // Predicated region
    $region10: #{tpu_custom_call.1} parent=1 // pred_check
      _
    $region11: #{tpu_custom_call.1} parent=1 // pred_check_branch
      %23 = sbr.rel (0) target = $region13
    $region12: #{tpu_custom_call.1} parent=1 // pred_region
      _
    $region13: #{tpu_custom_call.1} parent=1 // pred_fallthru
      _
    // Predicated region
    $region14: #{tpu_custom_call.1} parent=1 // pred_check
      _
    $region15: #{tpu_custom_call.1} parent=1 // pred_check_branch
      %25 = sbr.rel (0) target = $region17
    $region16: #{tpu_custom_call.1} parent=1 // pred_region
      _
    $region17: #{tpu_custom_call.1} parent=1 // pred_fallthru
      _
    // Predicated region
    $region18: #{tpu_custom_call.1} parent=1 // pred_check
      _
    $region19: #{tpu_custom_call.1} parent=1 // pred_check_branch
      %27 = sbr.rel (0) target = $region21
    $region20: #{tpu_custom_call.1} parent=1 // pred_region
      _
    $region21: #{tpu_custom_call.1} parent=1 // pred_fallthru
      _
    // Predicated region
    $region22: #{tpu_custom_call.1} parent=1 // pred_check
      _
    $region23: #{tpu_custom_call.1} parent=1 // pred_check_branch
      %29 = sbr.rel (0) target = $region25
    $region24: #{tpu_custom_call.1} parent=1 // pred_region
      %31 = vsyncadd [#allocation4], 0
      %s32 = sshll.u32 %s5, 4
      %s33 = int_to_ptr.hbm [resolvable:$true] %s32
      %s34 = sshll.u32 [#allocation3], 4
      %s35 = int_to_ptr.vmem [resolvable:$true] %s34
      %40 = dma.hbm_to_vmem [thread:$0]  %s33, 512, %s35, [#allocation4], 64, 64, 4
    $region25: #{tpu_custom_call.1} parent=1 // pred_fallthru
      _
    // Predicated region
    $region26: #{tpu_custom_call.1} parent=1 // pred_check
      _
    $region27: #{tpu_custom_call.1} parent=1 // pred_check_branch
      %42 = sbr.rel (0) target = $region29
    $region28: #{tpu_custom_call.1} parent=1 // pred_region
      _
    $region29: #{tpu_custom_call.1} parent=1 // pred_fallthru
      _
    // Predicated region
    $region30: #{tpu_custom_call.1} parent=1 // pred_check
      _
    $region31: #{tpu_custom_call.1} parent=1 // pred_check_branch
      %44 = sbr.rel (0) target = $region33
    $region32: #{tpu_custom_call.1} parent=1 // pred_region
      _
    $region33: #{tpu_custom_call.1} parent=1 // pred_fallthru
      _
    // Predicated region
    $region34: #{tpu_custom_call.1} parent=1 // pred_check
      _
    $region35: #{tpu_custom_call.1} parent=1 // pred_check_branch
      %46 = sbr.rel (0) target = $region37
    $region36: #{tpu_custom_call.1} parent=1 // pred_region
      _
    $region37: #{tpu_custom_call.1} parent=1 // pred_fallthru
      _
    // Predicated region
    $region38: #{tpu_custom_call.1} parent=1 // pred_check
      _
    $region39: #{tpu_custom_call.1} parent=1 // pred_check_branch
      %48 = sbr.rel (0) target = $region41
    $region40: #{tpu_custom_call.1} parent=1 // pred_region
      %50 = dma.done [#allocation4], 512
    $region41: #{tpu_custom_call.1} parent=1 // pred_fallthru
      _
    %v52 = vld [vmem:[%s0] sm:$0xff]
    %v53 = vpack.c.bf16 %v52, %v52
    %v54 = vld [vmem:[%s1] sm:$0xff]
    %v55 = vpack.c.bf16 %v54, %v54
    %v56 = vld [vmem:[%s2] sm:$0xf]
    %v57 = vld [vmem:[%s3] sm:$0x3]
    %vm58 = vcmask 31744
    %v60 = vsel %vm58, %v55, 0
    %vm62 = vcmask 1041408
    %v64 = vsel %vm62, %v57, 0
    %66 = vmatpush.bf16.msra.mxu0 0
    %67 = vmatpush.bf16.msra.mxu0 0
    %68 = vmatpush.bf16.msra.mxu0 0
    %69 = vmatpush.bf16.msra.mxu0 0
    %70 = vmatpush.bf16.msra.mxu0 0
    %71 = vmatpush.bf16.msra.mxu0 0
    %72 = vmatpush.bf16.msra.mxu0 0
    %73 = vmatpush.bf16.msra.mxu0 %v64
    %74 = vmatmul.bf16.gmra.mxu0 %v60
    %v75 = vpop.f32.mrf.mxu0
    %v76 = vadd.f32 0.0, %v75
    %v77 = vpop.f32.mrf.mxu0
    %78 = vdwg.mxu0
    %vm79 = vcmask 64512
    %v81 = vsel %vm79, %v53, 0
    %vm83 = vcmask 1043456
    %v85 = vsel %vm83, %v56, 0
    %87 = vmatpush.bf16.msra.mxu0 0
    %88 = vmatpush.bf16.msra.mxu0 0
    %89 = vmatpush.bf16.msra.mxu0 0
    %90 = vmatpush.bf16.msra.mxu0 0
    %91 = vmatpush.bf16.msra.mxu0 0
    %92 = vmatpush.bf16.msra.mxu0 0
    %93 = vmatpush.bf16.msra.mxu0 0
    %94 = vmatpush.bf16.msra.mxu0 %v85
    %95 = vmatmul.bf16.gmra.mxu0 %v81
    %v96 = vpop.f32.mrf.mxu0
    %v97 = vadd.f32 %v76, %v96
    %v98 = vpop.f32.mrf.mxu0
    %99 = vdwg.mxu0
    %v100 = vld [vmem:[%s4] sm:$0x1]
    %v102 = vperm.slane %v100, 0
    %v104 = vadd.f32 %v97, %v102
    %v105 = vpack.c.bf16 %v104, %v104
    %v106 = vunpack.c.l.bf16 %v105
    %v107 = vtanh.pop %v106
    %v108 = vpack.c.bf16 %v107, %v107
    %v109 = vld [vmem:[#allocation3] sm:$0xf]
    %v110 = vld [vmem:[#allocation3 + $0x4] sm:$0xf]
    %v111 = vld [vmem:[#allocation3 + $0x8] sm:$0xf]
    %v112 = vld [vmem:[#allocation3 + $0xc] sm:$0xf]
    %v113 = vld [vmem:[#allocation3 + $0x10] sm:$0xf]
    %v114 = vld [vmem:[#allocation3 + $0x14] sm:$0xf]
    %v115 = vld [vmem:[#allocation3 + $0x18] sm:$0xf]
    %v116 = vld [vmem:[#allocation3 + $0x1c] sm:$0xf]
    %v117 = vld [vmem:[%s6] sm:$0x1]
    %v119 = vperm.slane %v117, 0
    %v129 = vunpack.c.l.b16 %v109
    %v130 = vunpack.c.l.b16 %v110
    %v131 = vunpack.c.l.b16 %v111
    %v132 = vunpack.c.l.b16 %v112
    %v133 = vunpack.c.l.b16 %v113
    %v134 = vunpack.c.l.b16 %v114
    %v135 = vunpack.c.l.b16 %v115
    %v136 = vunpack.c.l.b16 %v116
    %v137 = vpack.c.b16 %v130, %v129
    %v138 = vpack.c.b16 %v132, %v131
    %v139 = vpack.c.b16 %v134, %v133
    %v140 = vpack.c.b16 %v136, %v135
    %vm145 = vcmask 523264
    %v147 = vsel %vm145, %v108, 0
    %149 = vmatpush.bf16.msra.mxu0 0
    %150 = vmatpush.bf16.msra.mxu0 0
    %151 = vmatpush.bf16.msra.mxu0 0
    %152 = vmatpush.bf16.msra.mxu0 0
    %153 = vmatpush.bf16.msra.mxu0 %v140
    %154 = vmatpush.bf16.msra.mxu0 %v139
    %155 = vmatpush.bf16.msra.mxu0 %v138
    %156 = vmatpush.bf16.msra.mxu0 %v137
    %157 = vmatmul.bf16.gmra.mxu0 %v147
    %v158 = vpop.f32.mrf.mxu0
    %v159 = vadd.f32 %v119, %v158
    %v160 = vpop.f32.mrf.mxu0
    %161 = vdwg.mxu0
    %v162 = vpack.c.bf16 %v159, %v159
    %v163 = vunpack.c.l.bf16 %v162
    %v164 = vtanh.pop %v163
    %v165 = vpack.c.bf16 %v164, %v164
    %v166 = vld [vmem:[%s7] sm:$0x1]
    %v168 = vpack.i.b16 %v166, %v166
    %v170 = vperm.slane %v168, 0
    %v171 = vunpack.c.l.bf16 %v165
    %v172 = vunpack.c.l.bf16 %v170
    %v173 = vmul.f32 %v171, %v172
    %v174 = vpack.c.bf16 %v173, %v173
    %v175 = vunpack.c.l.bf16 %v174
    %176 = vadd.xlane.f32.xlu0 %v175
    %v177 = vpop.xlane.xlu0 %176
    %v178 = vld [vmem:[#allocation2] sm:$0x1]
    %180 = vset.pattern.permute.xlu0 0
    %181 = vperm.xlu0 %180, %v178
    %v182 = vpop.permute.xlu0 %181
    %v184 = vperm.slane %v182, 0
    %v185 = vadd.f32 %v177, %v184
    %v187 = vlaneseq
    %v188 = vand.u32 %v187, 127
    %v189 = vperm.slane %v185, %v188
    %vm191 = vcmask 57344
    %192 = vst.msk [vmem:[#allocation6] sm:$0x1] %vm191, %v189
    // Predicated region
    $region42: #{tpu_custom_call.1} parent=1 // pred_check
      _
    $region43: #{tpu_custom_call.1} parent=1 // pred_check_branch
      %194 = sbr.rel (0) target = $region45
    $region44: #{tpu_custom_call.1} parent=1 // pred_region
      %196 = vsyncadd [#allocation5], 0
      %s198 = sshll.u32 [#allocation6], 4
      %s199 = int_to_ptr.vmem [resolvable:$true] %s198
      %s200 = sshll.u32 %s9, 4
      %s201 = int_to_ptr.hbm [resolvable:$true] %s200
      %203 = dma.vmem_to_hbm [thread:$0]  %s199, 16, %s201, [#allocation5]
    $region45: #{tpu_custom_call.1} parent=1 // pred_fallthru
      _
    // Predicated region
    $region46: #{tpu_custom_call.1} parent=1 // pred_check
      _
    $region47: #{tpu_custom_call.1} parent=1 // pred_check_branch
      %205 = sbr.rel (0) target = $region49
    $region48: #{tpu_custom_call.1} parent=1 // pred_region
      %207 = dma.done [#allocation5], 16
    $region49: #{tpu_custom_call.1} parent=1 // pred_fallthru
      _
    %208 = vsyncpa [#allocation4], 1
    %209 = vsyncpa [#allocation5], 1

</llo_original>
